<compile_context>
chip_gen: v7x
topology: tpu7x:2x2x1
jax: 0.10.0
libtpu: 0.0.40
codegen_flags: <defaults>
</compile_context>

<pallas_src>
import functools

import jax
import jax.numpy as jnp
from jax.experimental import pallas as pl
from jax.experimental.pallas import tpu as pltpu


def _round_up(x: int, m: int) -> int:
    return (x + m - 1) // m * m


def _cdiv(a: int, b: int) -> int:
    return (a + b - 1) // b


@functools.lru_cache(maxsize=1)
def _vmem_budget_bytes() -> int:
    """Usable VMEM budget: ~85% of physical capacity (generation aware)."""
    cap = 64 * 1024 * 1024          # conservative fallback (v7x per-TC VMEM)
    try:
        info = pltpu.get_tpu_info()
        cap = int(info.vmem_capacity_bytes) or cap
    except Exception:
        pass
    return max(16 * 1024 * 1024, int(cap * 0.85))


# --------------------------------------------------------------------------
# Kernels
# --------------------------------------------------------------------------
def _mlp_resident_kernel(x_ref, w1_ref, b1_ref, w2_ref, b2_ref, o_ref,
                         *scratch, k_chunk):
    """out = relu(x @ W1 + b1) @ W2 + b2 with all weights VMEM-resident.

    The hidden dim is processed in static, 128-aligned column chunks so the
    live f32 intermediate never exceeds (tm, k_chunk).  Multi-chunk
    accumulation goes through a VMEM scratch, not a value carried across the
    unrolled Python loop (which would spill every iteration).
    """
    x = x_ref[...]
    hid_pad = w1_ref.shape[1]
    chunks = list(range(0, hid_pad, k_chunk))

    if len(chunks) == 1:
        h = jnp.dot(x, w1_ref[...], preferred_element_type=jnp.float32)
        h = jnp.maximum(h + b1_ref[...], 0.0)          # bias + ReLU in f32
        out = jnp.dot(h.astype(w2_ref.dtype), w2_ref[...],
                      preferred_element_type=jnp.float32)
        o_ref[...] = (out + b2_ref[...]).astype(o_ref.dtype)
        return

    acc_ref = scratch[0]
    for idx, c in enumerate(chunks):
        ck = min(k_chunk, hid_pad - c)                  # 128-aligned, static
        h = jnp.dot(x, w1_ref[:, c:c + ck], preferred_element_type=jnp.float32)
        h = jnp.maximum(h + b1_ref[:, c:c + ck], 0.0)
        part = jnp.dot(h.astype(w2_ref.dtype), w2_ref[c:c + ck, :],
                       preferred_element_type=jnp.float32)
        if idx == 0:
            acc_ref[...] = part
        else:
            acc_ref[...] += part
    o_ref[...] = (acc_ref[...] + b2_ref[...]).astype(o_ref.dtype)


def _mlp_streamed_kernel(x_ref, w1_ref, b1_ref, w2_ref, b2_ref, o_ref, acc_ref):
    """Streamed-weights path: hidden axis lives on grid axis 1 ("arbitrary");
    W1/W2 K-chunks stream through double-buffered VMEM overlapping the MXU."""
    k = pl.program_id(1)

    @pl.when(k == 0)
    def _():
        acc_ref[...] = jnp.zeros_like(acc_ref)

    h = jnp.dot(x_ref[...], w1_ref[...], preferred_element_type=jnp.float32)
    h = jnp.maximum(h + b1_ref[...], 0.0)
    acc_ref[...] += jnp.dot(h.astype(w2_ref.dtype), w2_ref[...],
                            preferred_element_type=jnp.float32)

    @pl.when(k == pl.num_programs(1) - 1)
    def _():
        o_ref[...] = (acc_ref[...] + b2_ref[...]).astype(o_ref.dtype)


# --------------------------------------------------------------------------
# Wrapper
# --------------------------------------------------------------------------
def prepare_unary_factor_params(w1, b1, w2, b2, compute_dtype=jnp.bfloat16):
    """Pad feature dims to 128 multiples and cast weights to the MXU dtype
    ONCE, off the per-call path (re-padding each forward re-reads/writes the
    full weights in HBM).  Pass the result + out_dim to unary_factor_forward.
    """
    in_dim, hid_dim = w1.shape
    out_dim = w2.shape[1]
    in_pad, hid_pad, out_pad = (_round_up(d, 128)
                                for d in (in_dim, hid_dim, out_dim))
    w1p = jnp.pad(w1, ((0, in_pad - in_dim),
                       (0, hid_pad - hid_dim))).astype(compute_dtype)
    w2p = jnp.pad(w2, ((0, hid_pad - hid_dim),
                       (0, out_pad - out_dim))).astype(compute_dtype)
    b1p = jnp.pad(jnp.asarray(b1, jnp.float32).reshape(1, hid_dim),
                  ((0, 0), (0, hid_pad - hid_dim)))
    b2p = jnp.pad(jnp.asarray(b2, jnp.float32).reshape(1, out_dim),
                  ((0, 0), (0, out_pad - out_dim)))
    return (w1p, b1p, w2p, b2p), out_dim


@functools.partial(jax.jit, static_argnames=("out_dim", "tm", "max_k_chunk",
                                             "compute_dtype", "out_dtype"))
def unary_factor_forward(token_states, w1, b1, w2, b2, *, out_dim=None,
                         tm=None, max_k_chunk=512,
                         compute_dtype=jnp.bfloat16, out_dtype=None):
    """token_states: [batch, *, input_dim] -> [batch, *, output_dim].

    Weights are pre-transposed: w1 [in_dim, hidden], w2 [hidden, out_dim];
    biases [1, hidden] / [1, out_dim]  (nn.Linear's y = x @ W^T + b).
    Params may be raw f32 or already padded/cast via
    prepare_unary_factor_params (then pass out_dim explicitly since w2's last
    dim is the padded width).
    """
    lead_shape = token_states.shape[:-1]
    in_dim = token_states.shape[-1]
    if out_dim is None:
        out_dim = int(w2.shape[1])
    out_dtype = token_states.dtype if out_dtype is None else out_dtype

    # ---- padded feature dims: lane-dense loads/stores, aligned MXU ---------
    in_pad = _round_up(w1.shape[0], 128)
    hid_pad = _round_up(w1.shape[1], 128)
    out_pad = _round_up(w2.shape[1], 128)
    assert in_dim <= in_pad and out_dim <= out_pad

    cd = jnp.dtype(compute_dtype).itemsize
    od = jnp.dtype(out_dtype).itemsize
    budget = _vmem_budget_bytes()

    # ---- row tiling ---------------------------------------------------------
    x2d = token_states.reshape(-1, in_dim)
    m = x2d.shape[0]
    small_dims = max(in_pad, hid_pad, out_pad) <= 512
    if tm is None:
        tm = 512 if small_dims else 256       # big row tile in mem-bound regime
    # >= 2 row tiles whenever m allows so v7x's two TensorCores both get work.
    tm_eff = min(tm, max(8, _round_up(_cdiv(m, 2), 8)))
    m_pad = _round_up(m, tm_eff)
    grid_rows = m_pad // tm_eff

    # ---- regime selection: weights resident in VMEM vs streamed K-chunks ---
    k_chunk_res = min(max_k_chunk, hid_pad)
    n_chunks_res = _cdiv(hid_pad, k_chunk_res)
    resident_need = (
        2 * tm_eff * in_pad * cd                       # x tile   (double-buffered)
        + 2 * tm_eff * out_pad * od                    # out tile (double-buffered)
        + (in_pad + out_pad) * hid_pad * cd            # W1 + W2, single-buffered
        + 4 * (hid_pad + out_pad)                      # biases (f32, single)
        + (4 * tm_eff * out_pad if n_chunks_res > 1 else 0)  # acc scratch
        + 6 * tm_eff * k_chunk_res                     # live f32 h + bf16 copy
    )
    resident_need = resident_need * 5 // 4             # Mosaic internal headroom
    use_resident = resident_need <= budget

    if use_resident:
        hid_tgt, k_chunk, n_k = hid_pad, k_chunk_res, 1
        need = resident_need
    else:
        # Streamed path: hidden axis moves onto the grid; pad hidden to an
        # exact multiple of the (minimised) chunk size.
        n_k = _cdiv(hid_pad, max_k_chunk)
        k_chunk = _round_up(_cdiv(hid_pad, n_k), 128)
        hid_tgt = n_k * k_chunk
        need = (2 * tm_eff * in_pad * cd + 2 * tm_eff * out_pad * od
                + 2 * (in_pad + out_pad) * k_chunk * cd      # W chunks, 2 bufs
                + 2 * 4 * k_chunk + 4 * out_pad               # biases
                + 4 * tm_eff * out_pad                        # acc scratch
                + 6 * tm_eff * k_chunk) * 5 // 4              # f32 h + bf16 copy

    # ---- pad & cast (skipped per-array if params were pre-prepared) --------
    def pad2(a, rows, cols, dtype):
        r, c = a.shape
        if (r, c) == (rows, cols) and a.dtype == dtype:
            return a
        return jnp.pad(a, ((0, rows - r), (0, cols - c))).astype(dtype)

    xp = pad2(x2d, m_pad, in_pad, compute_dtype)
    w1p = pad2(w1, in_pad, hid_tgt, compute_dtype)
    w2p = pad2(w2, hid_tgt, out_pad, compute_dtype)
    b1p = pad2(jnp.asarray(b1).reshape(1, -1), 1, hid_tgt, jnp.float32)
    b2p = pad2(jnp.asarray(b2).reshape(1, -1), 1, out_pad, jnp.float32)

    # ---- build the pallas_call ---------------------------------------------
    if use_resident:
        kernel = functools.partial(_mlp_resident_kernel, k_chunk=k_chunk)
        single = dict(pipeline_mode=pl.Buffered(1))   # grid-invariant operands
        in_specs = [
            pl.BlockSpec((tm_eff, in_pad), lambda i: (i, 0)),
            pl.BlockSpec((in_pad, hid_tgt), lambda i: (0, 0), **single),
            pl.BlockSpec((1, hid_tgt), lambda i: (0, 0), **single),
            pl.BlockSpec((hid_tgt, out_pad), lambda i: (0, 0), **single),
            pl.BlockSpec((1, out_pad), lambda i: (0, 0), **single),
        ]
        out_specs = pl.BlockSpec((tm_eff, out_pad), lambda i: (i, 0))
        grid = (grid_rows,)
        semantics = ("parallel",)
        scratch = ([pltpu.VMEM((tm_eff, out_pad), jnp.float32)]
                   if n_chunks_res > 1 else [])
    else:
        kernel = _mlp_streamed_kernel
        in_specs = [
            pl.BlockSpec((tm_eff, in_pad), lambda i, k: (i, 0)),
            pl.BlockSpec((in_pad, k_chunk), lambda i, k: (0, k)),
            pl.BlockSpec((1, k_chunk), lambda i, k: (0, k)),
            pl.BlockSpec((k_chunk, out_pad), lambda i, k: (k, 0)),
            pl.BlockSpec((1, out_pad), lambda i, k: (0, 0),
                         pipeline_mode=pl.Buffered(1)),
        ]
        out_specs = pl.BlockSpec((tm_eff, out_pad), lambda i, k: (i, 0))
        grid = (grid_rows, n_k)
        semantics = ("parallel", "arbitrary")
        scratch = [pltpu.VMEM((tm_eff, out_pad), jnp.float32)]

    vmem_limit = int(min(max(need, 16 * 1024 * 1024), budget))

    out2d = pl.pallas_call(
        kernel,
        out_shape=jax.ShapeDtypeStruct((m_pad, out_pad), out_dtype),
        grid_spec=pltpu.PrefetchScalarGridSpec(
            num_scalar_prefetch=0,
            grid=grid,
            in_specs=in_specs,
            out_specs=out_specs,
            scratch_shapes=scratch,
        ),
        compiler_params=pltpu.CompilerParams(
            dimension_semantics=semantics,
            vmem_limit_bytes=vmem_limit,
        ),
    )(xp, w1p, b1p, w2p, b2p)

    out2d = out2d[:m, :out_dim]
    return out2d.reshape(*lead_shape, out_dim)


# --------------------------------------------------------------------------
# Param init + self-test
# --------------------------------------------------------------------------
def init_unary_factor_params(key, input_dim, output_dim, hidden_dim):
    """nn.Linear-style init U(-1/sqrt(fan_in), 1/sqrt(fan_in)); weights are
    returned pre-transposed to [in_features, out_features]."""
    k1, k2, k3, k4 = jax.random.split(key, 4)
    bound1 = 1.0 / jnp.sqrt(input_dim)
    w1 = jax.random.uniform(k1, (input_dim, hidden_dim), jnp.float32,
                            -bound1, bound1)
    b1 = jax.random.uniform(k2, (1, hidden_dim), jnp.float32, -bound1, bound1)
    bound2 = 1.0 / jnp.sqrt(hidden_dim)
    w2 = jax.random.uniform(k3, (hidden_dim, output_dim), jnp.float32,
                            -bound2, bound2)
    b2 = jax.random.uniform(k4, (1, output_dim), jnp.float32, -bound2, bound2)
    return w1, b1, w2, b2


if __name__ == "__main__":
    # token_states: [batch=2, seq=8, input_dim=32] -> [2, 8, output_dim=16]
    batch, seq, input_dim, hidden_dim, output_dim = 2, 8, 32, 32, 16

    key = jax.random.PRNGKey(0)
    k_x, k_p = jax.random.split(key)
    token_states = jax.random.normal(k_x, (batch, seq, input_dim), jnp.float32)
    w1, b1, w2, b2 = init_unary_factor_params(k_p, input_dim, output_dim,
                                              hidden_dim)

    # Pure-JAX f32 reference (eval-mode dropout == identity).
    ref = jnp.maximum(token_states @ w1 + b1[0], 0.0) @ w2 + b2[0]

    # Path 1: raw f32 params (pad/cast happens inside the jitted forward).
    out_raw = jax.block_until_ready(
        unary_factor_forward(token_states, w1, b1, w2, b2))

    # Path 2: pre-padded bf16 params (pad/cast hoisted off the per-call path).
    (w1p, b1p, w2p, b2p), odim = prepare_unary_factor_params(w1, b1, w2, b2)
    out_prep = jax.block_until_ready(
        unary_factor_forward(token_states, w1p, b1p, w2p, b2p, out_dim=odim))

    assert out_raw.shape == (batch, seq, output_dim)
    assert out_prep.shape == (batch, seq, output_dim)
    # bf16 MXU inputs with f32 accumulation -> loosened tolerance vs f32 ref.
    for o in (out_raw, out_prep):
        err = float(jnp.max(jnp.abs(o - ref)))
        assert jnp.allclose(o, ref, atol=5e-2, rtol=5e-2), err

    print("KERNEL_OK")
</pallas_src>

<mosaic_0001>
module attributes {stable_mosaic.version = 11 : i64} {
  func.func @_mlp_resident_kernel(%arg0: i32, %arg1: memref<8x128xbf16, #tpu.memory_space<vmem>>, %arg2: memref<128x128xbf16, #tpu.memory_space<vmem>>, %arg3: memref<1x128xf32, #tpu.memory_space<vmem>>, %arg4: memref<128x128xbf16, #tpu.memory_space<vmem>>, %arg5: memref<1x128xf32, #tpu.memory_space<vmem>>, %arg6: memref<8x128xf32, #tpu.memory_space<vmem>>) attributes {dimension_semantics = [#tpu.dimension_semantics<parallel>], iteration_bounds = array<i64: 2>, scalar_prefetch = 0 : i64, scratch_operands = 0 : i64, tpu.core_type = #tpu.core_type<tc>, window_params = [{transform_indices = @transform_0, window_bounds = array<i64: 8, 128>}, {pipeline_mode = #tpu.pipeline_mode<synchronous>, transform_indices = @transform_1, window_bounds = array<i64: 128, 128>}, {pipeline_mode = #tpu.pipeline_mode<synchronous>, transform_indices = @transform_2, window_bounds = array<i64: 1, 128>}, {pipeline_mode = #tpu.pipeline_mode<synchronous>, transform_indices = @transform_3, window_bounds = array<i64: 128, 128>}, {pipeline_mode = #tpu.pipeline_mode<synchronous>, transform_indices = @transform_4, window_bounds = array<i64: 1, 128>}, {transform_indices = @transform_5, window_bounds = array<i64: 8, 128>}]} {
    %c0 = arith.constant 0 : index
    %c0_0 = arith.constant 0 : index
    %0 = vector.load %arg1[%c0, %c0_0] : memref<8x128xbf16, #tpu.memory_space<vmem>>, vector<8x128xbf16>
    %c0_1 = arith.constant 0 : index
    %c0_2 = arith.constant 0 : index
    %1 = vector.load %arg2[%c0_1, %c0_2] : memref<128x128xbf16, #tpu.memory_space<vmem>>, vector<128x128xbf16>
    %cst = arith.constant dense<0.000000e+00> : vector<8x128xf32>
    %2 = tpu.matmul %0, %1, %cst {dimension_numbers = #tpu.dot_dimension_numbers<[1], [0], [0], [1], [0, 0, 1, 1], [], []>} : vector<8x128xbf16>, vector<128x128xbf16>, vector<8x128xf32> -> vector<8x128xf32>
    %c0_3 = arith.constant 0 : index
    %c0_4 = arith.constant 0 : index
    %3 = vector.load %arg3[%c0_3, %c0_4] : memref<1x128xf32, #tpu.memory_space<vmem>>, vector<1x128xf32>
    %4 = vector.broadcast %3 : vector<1x128xf32> to vector<8x128xf32>
    %5 = arith.addf %2, %4 : vector<8x128xf32>
    %cst_5 = arith.constant 0.000000e+00 : f32
    %6 = vector.broadcast %cst_5 : f32 to vector<8x128xf32>
    %7 = arith.maximumf %5, %6 : vector<8x128xf32>
    %8 = arith.truncf %7 : vector<8x128xf32> to vector<8x128xbf16>
    %c0_6 = arith.constant 0 : index
    %c0_7 = arith.constant 0 : index
    %9 = vector.load %arg4[%c0_6, %c0_7] : memref<128x128xbf16, #tpu.memory_space<vmem>>, vector<128x128xbf16>
    %cst_8 = arith.constant dense<0.000000e+00> : vector<8x128xf32>
    %10 = tpu.matmul %8, %9, %cst_8 {dimension_numbers = #tpu.dot_dimension_numbers<[1], [0], [0], [1], [0, 0, 1, 1], [], []>} : vector<8x128xbf16>, vector<128x128xbf16>, vector<8x128xf32> -> vector<8x128xf32>
    %c0_9 = arith.constant 0 : index
    %c0_10 = arith.constant 0 : index
    %11 = vector.load %arg5[%c0_9, %c0_10] : memref<1x128xf32, #tpu.memory_space<vmem>>, vector<1x128xf32>
    %12 = vector.broadcast %11 : vector<1x128xf32> to vector<8x128xf32>
    %13 = arith.addf %10, %12 : vector<8x128xf32>
    %c0_11 = arith.constant 0 : index
    %c0_12 = arith.constant 0 : index
    %14 = vector.load %arg6[%c0_11, %c0_12] : memref<8x128xf32, #tpu.memory_space<vmem>>, vector<8x128xf32>
    tpu.vector_store %arg6[%c0_11, %c0_12], %13 {strides = array<i32>} : memref<8x128xf32, #tpu.memory_space<vmem>>, vector<8x128xf32>,
    return
  }
  func.func @transform_0(%arg0: i32) -> (i32, i32) {
    %c0_i32 = arith.constant 0 : i32
    %c0_i32_0 = arith.constant 0 : i32
    return %arg0, %c0_i32 : i32, i32
  }
  func.func @transform_1(%arg0: i32) -> (i32, i32) {
    %c0_i32 = arith.constant 0 : i32
    %c0_i32_0 = arith.constant 0 : i32
    %c0_i32_1 = arith.constant 0 : i32
    return %c0_i32, %c0_i32_0 : i32, i32
  }
  func.func @transform_2(%arg0: i32) -> (i32, i32) {
    %c0_i32 = arith.constant 0 : i32
    %c0_i32_0 = arith.constant 0 : i32
    %c0_i32_1 = arith.constant 0 : i32
    return %c0_i32, %c0_i32_0 : i32, i32
  }
  func.func @transform_3(%arg0: i32) -> (i32, i32) {
    %c0_i32 = arith.constant 0 : i32
    %c0_i32_0 = arith.constant 0 : i32
    %c0_i32_1 = arith.constant 0 : i32
    return %c0_i32, %c0_i32_0 : i32, i32
  }
  func.func @transform_4(%arg0: i32) -> (i32, i32) {
    %c0_i32 = arith.constant 0 : i32
    %c0_i32_0 = arith.constant 0 : i32
    %c0_i32_1 = arith.constant 0 : i32
    return %c0_i32, %c0_i32_0 : i32, i32
  }
  func.func @transform_5(%arg0: i32) -> (i32, i32) {
    %c0_i32 = arith.constant 0 : i32
    %c0_i32_0 = arith.constant 0 : i32
    return %arg0, %c0_i32 : i32, i32
  }
}

</mosaic_0001>

<llo_original>
// kernel: unary_factor_forward.1
$region0: #{unary_factor_forward.1}
  #allocation0 [shape = 'u32[]', space=smem, size = 0x4, offset = 0x4, fixed_abs, tag = 'smem constant byte address 0x4 - core index']
  #allocation1 [shape = 'u32[144,128]{1,0:T(1,128)}', space=vmem, size = 0x12000, scoped, tag = 'internal scratch']
  %s0 = inlined_call_operand.vmem [shape: bf16[16,128], index: 0, kind: input, shape index: {}]
  %s1 = inlined_call_operand.vmem [shape: bf16[128,128], index: 1, kind: input, shape index: {}]
  %s2 = inlined_call_operand.vmem [shape: f32[1,128], index: 2, kind: input, shape index: {}]
  %s3 = inlined_call_operand.vmem [shape: bf16[128,128], index: 3, kind: input, shape index: {}]
  %s4 = inlined_call_operand.vmem [shape: f32[1,128], index: 4, kind: input, shape index: {}]
  %s5 = inlined_call_operand.vmem [shape: f32[16,128], index: 5, kind: output, shape index: {}]
  %s6 = sld [smem:[#allocation0]]
  $region53: #{unary_factor_forward.1} parent=0
    _
  %s8 = ssub.s32 1, %s6
  %s9 = scalar_select 0, %s8, %s6
  loop: start=0, step=1, limit=4
  $region2: #{unary_factor_forward.1} parent=0 // loop_pre_header
    _
  $region3: #{unary_factor_forward.1} parent=0 // loop_header
    %s11 = sphi 0, %s15
    %p12 = scmp.ge.s32.totalorder %s11, 4
    %s21 = sphi 0, %s23
    %s24 = sphi 0, %s21
    %s25 = sphi 0, %s24
    %s41 = sphi 0, %s25
    %s45 = sphi 0, %s45
    %s47 = sphi 0, %s45
    %s48 = sphi 0, %s47
    %s62 = sphi 0, %s48
    %s66 = sphi 0, %s66
    %s68 = sphi 0, %s66
    %s69 = sphi 0, %s68
    %s83 = sphi 0, %s69
    %s87 = sphi 0, %s87
    %s89 = sphi 0, %s87
    %s90 = sphi 0, %s89
    %s104 = sphi 0, %s90
    %s108 = sphi 0, %s108
    %s110 = sphi 0, %s108
    %s111 = sphi 0, %s110
    %s125 = sphi 0, %s111
    %s131 = sphi 0, %s133
    %s134 = sphi 0, %s131
    %s135 = sphi 0, %s134
    %s151 = sphi 0, %s135
  $region4: #{unary_factor_forward.1} parent=0 // loop_header_branch
    %14 = sbr.rel (%p12) target = $region8
  $region5: #{unary_factor_forward.1} parent=0 // loop_body
    %s16 = ssub.s32 %s11, 1
    %s17 = ssub.s32 %s11, 2
    %s18 = sadd.s32 %s11, 1
    %s19 = ssub.s32 %s11, %s18
    %p20 = scmp.eq.s32.totalorder %s19, 0
    %s22 = sadd.s32 %s21, 1
    %s23 = scalar_select %p20, %s21, %s22
    %p26 = pneg %p20
    %p27 = scmp.eq.s32.totalorder %s11, 1
    %p28 = por %p26, %p27
    %p29 = scmp.ne.s32.totalorder %s21, %s24
    %p30 = scmp.eq.s32.totalorder %s11, 0
    %p31 = por %p29, %p30
    %p32 = scmp.ne.s32.totalorder %s21, %s24
    %p33 = scmp.eq.s32.totalorder %s16, 1
    %p34 = por %p32, %p33
    %p35 = scmp.ne.s32.totalorder %s24, %s25
    %p36 = scmp.eq.s32.totalorder %s16, 0
    %p37 = por %p35, %p36
    %p38 = scmp.ne.s32.totalorder %s24, %s25
    %p39 = scmp.eq.s32.totalorder %s17, 1
    %p40 = por %p38, %p39
    %p42 = scmp.ne.s32.totalorder %s25, %s41
    %p43 = scmp.eq.s32.totalorder %s17, 0
    %p44 = por %p42, %p43
    %s46 = sadd.s32 %s45, 1
    %p49 = scmp.eq.s32.totalorder %s11, 1
    %p50 = scmp.ne.s32.totalorder %s45, %s47
    %p51 = scmp.eq.s32.totalorder %s11, 0
    %p52 = por %p50, %p51
    %p53 = scmp.ne.s32.totalorder %s45, %s47
    %p54 = scmp.eq.s32.totalorder %s16, 1
    %p55 = por %p53, %p54
    %p56 = scmp.ne.s32.totalorder %s47, %s48
    %p57 = scmp.eq.s32.totalorder %s16, 0
    %p58 = por %p56, %p57
    %p59 = scmp.ne.s32.totalorder %s47, %s48
    %p60 = scmp.eq.s32.totalorder %s17, 1
    %p61 = por %p59, %p60
    %p63 = scmp.ne.s32.totalorder %s48, %s62
    %p64 = scmp.eq.s32.totalorder %s17, 0
    %p65 = por %p63, %p64
    %s67 = sadd.s32 %s66, 1
    %p70 = scmp.eq.s32.totalorder %s11, 1
    %p71 = scmp.ne.s32.totalorder %s66, %s68
    %p72 = scmp.eq.s32.totalorder %s11, 0
    %p73 = por %p71, %p72
    %p74 = scmp.ne.s32.totalorder %s66, %s68
    %p75 = scmp.eq.s32.totalorder %s16, 1
    %p76 = por %p74, %p75
    %p77 = scmp.ne.s32.totalorder %s68, %s69
    %p78 = scmp.eq.s32.totalorder %s16, 0
    %p79 = por %p77, %p78
    %p80 = scmp.ne.s32.totalorder %s68, %s69
    %p81 = scmp.eq.s32.totalorder %s17, 1
    %p82 = por %p80, %p81
    %p84 = scmp.ne.s32.totalorder %s69, %s83
    %p85 = scmp.eq.s32.totalorder %s17, 0
    %p86 = por %p84, %p85
    %s88 = sadd.s32 %s87, 1
    %p91 = scmp.eq.s32.totalorder %s11, 1
    %p92 = scmp.ne.s32.totalorder %s87, %s89
    %p93 = scmp.eq.s32.totalorder %s11, 0
    %p94 = por %p92, %p93
    %p95 = scmp.ne.s32.totalorder %s87, %s89
    %p96 = scmp.eq.s32.totalorder %s16, 1
    %p97 = por %p95, %p96
    %p98 = scmp.ne.s32.totalorder %s89, %s90
    %p99 = scmp.eq.s32.totalorder %s16, 0
    %p100 = por %p98, %p99
    %p101 = scmp.ne.s32.totalorder %s89, %s90
    %p102 = scmp.eq.s32.totalorder %s17, 1
    %p103 = por %p101, %p102
    %p105 = scmp.ne.s32.totalorder %s90, %s104
    %p106 = scmp.eq.s32.totalorder %s17, 0
    %p107 = por %p105, %p106
    %s109 = sadd.s32 %s108, 1
    %p112 = scmp.eq.s32.totalorder %s11, 1
    %p113 = scmp.ne.s32.totalorder %s108, %s110
    %p114 = scmp.eq.s32.totalorder %s11, 0
    %p115 = por %p113, %p114
    %p116 = scmp.ne.s32.totalorder %s108, %s110
    %p117 = scmp.eq.s32.totalorder %s16, 1
    %p118 = por %p116, %p117
    %p119 = scmp.ne.s32.totalorder %s110, %s111
    %p120 = scmp.eq.s32.totalorder %s16, 0
    %p121 = por %p119, %p120
    %p122 = scmp.ne.s32.totalorder %s110, %s111
    %p123 = scmp.eq.s32.totalorder %s17, 1
    %p124 = por %p122, %p123
    %p126 = scmp.ne.s32.totalorder %s111, %s125
    %p127 = scmp.eq.s32.totalorder %s17, 0
    %p128 = por %p126, %p127
    %s129 = ssub.s32 %s11, %s18
    %p130 = scmp.eq.s32.totalorder %s129, 0
    %s132 = sadd.s32 %s131, 1
    %s133 = scalar_select %p130, %s131, %s132
    %p136 = pneg %p130
    %p137 = scmp.eq.s32.totalorder %s11, 1
    %p138 = por %p136, %p137
    %p139 = scmp.ne.s32.totalorder %s131, %s134
    %p140 = scmp.eq.s32.totalorder %s11, 0
    %p141 = por %p139, %p140
    %p142 = scmp.ne.s32.totalorder %s131, %s134
    %p143 = scmp.eq.s32.totalorder %s16, 1
    %p144 = por %p142, %p143
    %p145 = scmp.ne.s32.totalorder %s134, %s135
    %p146 = scmp.eq.s32.totalorder %s16, 0
    %p147 = por %p145, %p146
    %p148 = scmp.ne.s32.totalorder %s134, %s135
    %p149 = scmp.eq.s32.totalorder %s17, 1
    %p150 = por %p148, %p149
    %p152 = scmp.ne.s32.totalorder %s135, %s151
    %p153 = scmp.eq.s32.totalorder %s17, 0
    %p154 = por %p152, %p153
    %p155 = scmp.le.s32.totalorder 1, %s11
    %p156 = scmp.lt.s32.totalorder %s11, 3
    %p157 = pnand %p155, %p156
    %p158 = pneg %p157
    // Predicated region
    $region9: #{unary_factor_forward.1} parent=5 // pred_check
      _
    $region10: #{unary_factor_forward.1} parent=5 // pred_check_branch
      %160 = sbr.rel (%p157) target = $region12
    $region11: #{unary_factor_forward.1} parent=5 // pred_region
      %s161 = ssub.s32 %s11, 1
      // Predicated region
      $region13: #{unary_factor_forward.1} parent=11 // pred_check
        %p162 = pneg %p58
      $region14: #{unary_factor_forward.1} parent=11 // pred_check_branch
        %164 = sbr.rel (%p162) target = $region16
      $region15: #{unary_factor_forward.1} parent=11 // pred_region
        _
      $region16: #{unary_factor_forward.1} parent=11 // pred_fallthru
        _
      // Predicated region
      $region17: #{unary_factor_forward.1} parent=11 // pred_check
        %p165 = pneg %p79
      $region18: #{unary_factor_forward.1} parent=11 // pred_check_branch
        %167 = sbr.rel (%p165) target = $region20
      $region19: #{unary_factor_forward.1} parent=11 // pred_region
        _
      $region20: #{unary_factor_forward.1} parent=11 // pred_fallthru
        _
      // Predicated region
      $region21: #{unary_factor_forward.1} parent=11 // pred_check
        %p168 = pneg %p100
      $region22: #{unary_factor_forward.1} parent=11 // pred_check_branch
        %170 = sbr.rel (%p168) target = $region24
      $region23: #{unary_factor_forward.1} parent=11 // pred_region
        _
      $region24: #{unary_factor_forward.1} parent=11 // pred_fallthru
        _
      // Predicated region
      $region25: #{unary_factor_forward.1} parent=11 // pred_check
        %p171 = pneg %p121
      $region26: #{unary_factor_forward.1} parent=11 // pred_check_branch
        %173 = sbr.rel (%p171) target = $region28
      $region27: #{unary_factor_forward.1} parent=11 // pred_region
        _
      $region28: #{unary_factor_forward.1} parent=11 // pred_fallthru
        _
    $region12: #{unary_factor_forward.1} parent=5 // pred_fallthru
      _
    %p174 = scmp.lt.s32.totalorder %s11, 2
    // Predicated region
    $region29: #{unary_factor_forward.1} parent=5 // pred_check
      %p175 = pneg %p174
    $region30: #{unary_factor_forward.1} parent=5 // pred_check_branch
      %177 = sbr.rel (%p175) target = $region32
    $region31: #{unary_factor_forward.1} parent=5 // pred_region
      // Predicated region
      $region33: #{unary_factor_forward.1} parent=31 // pred_check
        %p178 = pneg %p31
      $region34: #{unary_factor_forward.1} parent=31 // pred_check_branch
        %180 = sbr.rel (%p178) target = $region36
      $region35: #{unary_factor_forward.1} parent=31 // pred_region
        %p181 = scmp.lt.s32.totalorder %s11, 1
        %s182 = scalar_select %p181, %s11, 1
        %s183 = smul.addr %s182, 4
        %s184 = scalar_lea.vmem %s0, %s183
      $region36: #{unary_factor_forward.1} parent=31 // pred_fallthru
        _
    $region32: #{unary_factor_forward.1} parent=5 // pred_fallthru
      _
    %p185 = scmp.le.s32.totalorder 1, %s11
    %p186 = scmp.lt.s32.totalorder %s11, 3
    %p187 = pnand %p185, %p186
    %p188 = pneg %p187
    // Predicated region
    $region37: #{unary_factor_forward.1} parent=5 // pred_check
      _
    $region38: #{unary_factor_forward.1} parent=5 // pred_check_branch
      %190 = sbr.rel (%p187) target = $region40
    $region39: #{unary_factor_forward.1} parent=5 // pred_region
      %s191 = ssub.s32 %s11, 1
      %p192 = scmp.lt.s32.totalorder %s16, 1
      %s193 = scalar_select %p192, %s16, 1
      %s194 = smul.addr %s193, 4
      %s195 = scalar_lea.vmem %s0, %s194
      %p196 = pneg %p37
      %p197 = pneg %p34
      %p198 = pneg %p58
      %p199 = pneg %p55
      %p200 = pneg %p79
      %p201 = pneg %p76
      %p202 = pneg %p100
      %p203 = pneg %p97
      %p204 = pneg %p121
      %p205 = pneg %p118
      %p206 = pneg %p147
      %p207 = pneg %p144
      %p208 = scmp.lt.s32.totalorder %s16, 1
      %s209 = scalar_select %p208, %s16, 1
      %s210 = smul.addr %s209, 8
      %s211 = scalar_lea.vmem %s5, %s210
      %p212 = scmp.lt.s32.totalorder %s16, 1
      %s213 = scalar_select %p212, %s16, 1
      %s214 = smul.addr %s213, 4
      %s215 = scalar_lea.vmem %s0, %s214
      %p216 = scmp.lt.s32.totalorder %s16, 1
      %s217 = scalar_select %p216, %s16, 1
      %s218 = smul.addr %s217, 8
      %s219 = scalar_lea.vmem %s5, %s218
      %v221 = vld [vmem:[%s215] sm:$0xf]
      %v222 = vld [vmem:[%s1] sm:$0xf]
      %v223 = vld [vmem:[%s1 + $0x4] sm:$0xf]
      %v224 = vld [vmem:[%s1 + $0x8] sm:$0xf]
      %v225 = vld [vmem:[%s1 + $0xc] sm:$0xf]
      %v226 = vld [vmem:[%s1 + $0x10] sm:$0xf]
      %v227 = vld [vmem:[%s1 + $0x14] sm:$0xf]
      %v228 = vld [vmem:[%s1 + $0x18] sm:$0xf]
      %v229 = vld [vmem:[%s1 + $0x1c] sm:$0xf]
      %v230 = vld [vmem:[%s1 + $0x20] sm:$0xf]
      %v231 = vld [vmem:[%s1 + $0x24] sm:$0xf]
      %v232 = vld [vmem:[%s1 + $0x28] sm:$0xf]
      %v233 = vld [vmem:[%s1 + $0x2c] sm:$0xf]
      %v234 = vld [vmem:[%s1 + $0x30] sm:$0xf]
      %v235 = vld [vmem:[%s1 + $0x34] sm:$0xf]
      %v236 = vld [vmem:[%s1 + $0x38] sm:$0xf]
      %v237 = vld [vmem:[%s1 + $0x3c] sm:$0xf]
      %v238 = vld [vmem:[%s2] sm:$0x1]
      %v240 = vlaneseq
      %v241 = vshrl.u32 %v240, 7
      %v242 = vsub.s32 0, %v241
      %v243 = vrot.slane %v238, %v242
      %v261 = vunpack.c.l.b16 %v222
      %v262 = vunpack.c.l.b16 %v223
      %v263 = vunpack.c.l.b16 %v224
      %v264 = vunpack.c.l.b16 %v225
      %v265 = vunpack.c.l.b16 %v226
      %v266 = vunpack.c.l.b16 %v227
      %v267 = vunpack.c.l.b16 %v228
      %v268 = vunpack.c.l.b16 %v229
      %v269 = vunpack.c.l.b16 %v230
      %v270 = vunpack.c.l.b16 %v231
      %v271 = vunpack.c.l.b16 %v232
      %v272 = vunpack.c.l.b16 %v233
      %v273 = vunpack.c.l.b16 %v234
      %v274 = vunpack.c.l.b16 %v235
      %v275 = vunpack.c.l.b16 %v236
      %v276 = vunpack.c.l.b16 %v237
      %v277 = vpack.c.b16 %v262, %v261
      %v278 = vpack.c.b16 %v264, %v263
      %v279 = vpack.c.b16 %v266, %v265
      %v280 = vpack.c.b16 %v268, %v267
      %v281 = vpack.c.b16 %v270, %v269
      %v282 = vpack.c.b16 %v272, %v271
      %v283 = vpack.c.b16 %v274, %v273
      %v284 = vpack.c.b16 %v276, %v275
      %293 = vmatprep.subr.bf16.mxu0 0
      %294 = vmatpush1.bf16.msra.mxu0 %v277
      %295 = vmatprep.subr.bf16.mxu0 0
      %296 = vmatpush1.bf16.msra.mxu0 %v278
      %297 = vmatprep.subr.bf16.mxu0 0
      %298 = vmatpush1.bf16.msra.mxu0 %v279
      %299 = vmatprep.subr.bf16.mxu0 0
      %300 = vmatpush1.bf16.msra.mxu0 %v280
      %301 = vmatprep.subr.bf16.mxu0 0
      %302 = vmatpush1.bf16.msra.mxu0 %v281
      %303 = vmatprep.subr.bf16.mxu0 0
      %304 = vmatpush1.bf16.msra.mxu0 %v282
      %305 = vmatprep.subr.bf16.mxu0 0
      %306 = vmatpush1.bf16.msra.mxu0 %v283
      %307 = vmatprep.subr.bf16.mxu0 0
      %308 = vmatpush1.bf16.msra.mxu0 %v284
      %309 = vmatprep.subr.bf16.mxu0 0
      %310 = vmatpush1.bf16.msra.mxu0 0
      %311 = vmatprep.subr.bf16.mxu0 0
      %312 = vmatpush1.bf16.msra.mxu0 0
      %313 = vmatprep.subr.bf16.mxu0 0
      %314 = vmatpush1.bf16.msra.mxu0 0
      %315 = vmatprep.subr.bf16.mxu0 0
      %316 = vmatpush1.bf16.msra.mxu0 0
      %317 = vmatprep.subr.bf16.mxu0 0
      %318 = vmatpush1.bf16.msra.mxu0 0
      %319 = vmatprep.subr.bf16.mxu0 0
      %320 = vmatpush1.bf16.msra.mxu0 0
      %321 = vmatprep.subr.bf16.mxu0 0
      %322 = vmatpush1.bf16.msra.mxu0 0
      %323 = vmatprep.subr.bf16.mxu0 0
      %324 = vmatpush1.bf16.msra.mxu0 0
      %325 = vmatprep.mubr.bf16.mxu0 0
      %326 = vmatmul.mubr.bf16.gmra.mrb[0].mxu0 %v221
      %v327 = vpop.f32.mrb[0].mxu0
      %v328 = vadd.f32 %v243, %v327
      %v329 = vpop.f32.mrb[0].mxu0
      %v330 = vpop.f32.mrb[0].mxu0
      %v331 = vpop.f32.mrb[0].mxu0
      %332 = vdwg.mxu0
      %v333 = vmax.f32 %v328, 0.0
      %v334 = vpack.c.bf16 %v333, %v333
      %v335 = vld [vmem:[%s3] sm:$0xf]
      %v336 = vld [vmem:[%s3 + $0x4] sm:$0xf]
      %v337 = vld [vmem:[%s3 + $0x8] sm:$0xf]
      %v338 = vld [vmem:[%s3 + $0xc] sm:$0xf]
      %v339 = vld [vmem:[%s3 + $0x10] sm:$0xf]
      %v340 = vld [vmem:[%s3 + $0x14] sm:$0xf]
      %v341 = vld [vmem:[%s3 + $0x18] sm:$0xf]
      %v342 = vld [vmem:[%s3 + $0x1c] sm:$0xf]
      %v343 = vld [vmem:[%s3 + $0x20] sm:$0xf]
      %v344 = vld [vmem:[%s3 + $0x24] sm:$0xf]
      %v345 = vld [vmem:[%s3 + $0x28] sm:$0xf]
      %v346 = vld [vmem:[%s3 + $0x2c] sm:$0xf]
      %v347 = vld [vmem:[%s3 + $0x30] sm:$0xf]
      %v348 = vld [vmem:[%s3 + $0x34] sm:$0xf]
      %v349 = vld [vmem:[%s3 + $0x38] sm:$0xf]
      %v350 = vld [vmem:[%s3 + $0x3c] sm:$0xf]
      %v351 = vld [vmem:[%s4] sm:$0x1]
      %v353 = vlaneseq
      %v354 = vshrl.u32 %v353, 7
      %v355 = vsub.s32 0, %v354
      %v356 = vrot.slane %v351, %v355
      %v374 = vunpack.c.l.b16 %v335
      %v375 = vunpack.c.l.b16 %v336
      %v376 = vunpack.c.l.b16 %v337
      %v377 = vunpack.c.l.b16 %v338
      %v378 = vunpack.c.l.b16 %v339
      %v379 = vunpack.c.l.b16 %v340
      %v380 = vunpack.c.l.b16 %v341
      %v381 = vunpack.c.l.b16 %v342
      %v382 = vunpack.c.l.b16 %v343
      %v383 = vunpack.c.l.b16 %v344
      %v384 = vunpack.c.l.b16 %v345
      %v385 = vunpack.c.l.b16 %v346
      %v386 = vunpack.c.l.b16 %v347
      %v387 = vunpack.c.l.b16 %v348
      %v388 = vunpack.c.l.b16 %v349
      %v389 = vunpack.c.l.b16 %v350
      %v390 = vpack.c.b16 %v375, %v374
      %v391 = vpack.c.b16 %v377, %v376
      %v392 = vpack.c.b16 %v379, %v378
      %v393 = vpack.c.b16 %v381, %v380
      %v394 = vpack.c.b16 %v383, %v382
      %v395 = vpack.c.b16 %v385, %v384
      %v396 = vpack.c.b16 %v387, %v386
      %v397 = vpack.c.b16 %v389, %v388
      %406 = vmatprep.subr.bf16.mxu0 0
      %407 = vmatpush1.bf16.msra.mxu0 %v390
      %408 = vmatprep.subr.bf16.mxu0 0
      %409 = vmatpush1.bf16.msra.mxu0 %v391
      %410 = vmatprep.subr.bf16.mxu0 0
      %411 = vmatpush1.bf16.msra.mxu0 %v392
      %412 = vmatprep.subr.bf16.mxu0 0
      %413 = vmatpush1.bf16.msra.mxu0 %v393
      %414 = vmatprep.subr.bf16.mxu0 0
      %415 = vmatpush1.bf16.msra.mxu0 %v394
      %416 = vmatprep.subr.bf16.mxu0 0
      %417 = vmatpush1.bf16.msra.mxu0 %v395
      %418 = vmatprep.subr.bf16.mxu0 0
      %419 = vmatpush1.bf16.msra.mxu0 %v396
      %420 = vmatprep.subr.bf16.mxu0 0
      %421 = vmatpush1.bf16.msra.mxu0 %v397
      %422 = vmatprep.subr.bf16.mxu0 0
      %423 = vmatpush1.bf16.msra.mxu0 0
      %424 = vmatprep.subr.bf16.mxu0 0
      %425 = vmatpush1.bf16.msra.mxu0 0
      %426 = vmatprep.subr.bf16.mxu0 0
      %427 = vmatpush1.bf16.msra.mxu0 0
      %428 = vmatprep.subr.bf16.mxu0 0
      %429 = vmatpush1.bf16.msra.mxu0 0
      %430 = vmatprep.subr.bf16.mxu0 0
      %431 = vmatpush1.bf16.msra.mxu0 0
      %432 = vmatprep.subr.bf16.mxu0 0
      %433 = vmatpush1.bf16.msra.mxu0 0
      %434 = vmatprep.subr.bf16.mxu0 0
      %435 = vmatpush1.bf16.msra.mxu0 0
      %436 = vmatprep.subr.bf16.mxu0 0
      %437 = vmatpush1.bf16.msra.mxu0 0
      %438 = vmatprep.mubr.bf16.mxu0 0
      %439 = vmatmul.mubr.bf16.gmra.mrb[0].mxu0 %v334
      %v440 = vpop.f32.mrb[0].mxu0
      %v441 = vadd.f32 %v356, %v440
      %v442 = vpop.f32.mrb[0].mxu0
      %v443 = vpop.f32.mrb[0].mxu0
      %v444 = vpop.f32.mrb[0].mxu0
      %445 = vdwg.mxu0
      %446 = vst [vmem:[%s219] sm:$0xff] %v441
      %p447 = scmp.lt.s32.totalorder %s16, 1
      %s448 = scalar_select %p447, %s16, 1
      %s449 = smul.addr %s448, 8
      %s450 = scalar_lea.vmem %s5, %s449
      // Predicated region
      $region41: #{unary_factor_forward.1} parent=39 // pred_check
        %p451 = pneg %p144
      $region42: #{unary_factor_forward.1} parent=39 // pred_check_branch
        %453 = sbr.rel (%p451) target = $region44
      $region43: #{unary_factor_forward.1} parent=39 // pred_region
        _
      $region44: #{unary_factor_forward.1} parent=39 // pred_fallthru
        _
    $region40: #{unary_factor_forward.1} parent=5 // pred_fallthru
      _
    %p454 = scmp.le.s32.totalorder 2, %s11
    // Predicated region
    $region45: #{unary_factor_forward.1} parent=5 // pred_check
      %p455 = pneg %p454
    $region46: #{unary_factor_forward.1} parent=5 // pred_check_branch
      %457 = sbr.rel (%p455) target = $region48
    $region47: #{unary_factor_forward.1} parent=5 // pred_region
      %s458 = ssub.s32 %s11, 2
      // Predicated region
      $region49: #{unary_factor_forward.1} parent=47 // pred_check
        %p459 = pneg %p150
      $region50: #{unary_factor_forward.1} parent=47 // pred_check_branch
        %461 = sbr.rel (%p459) target = $region52
      $region51: #{unary_factor_forward.1} parent=47 // pred_region
        %p462 = scmp.lt.s32.totalorder %s17, 1
        %s463 = scalar_select %p462, %s17, 1
        %s464 = smul.addr %s463, 8
        %s465 = scalar_lea.vmem %s5, %s464
      $region52: #{unary_factor_forward.1} parent=47 // pred_fallthru
        _
    $region48: #{unary_factor_forward.1} parent=5 // pred_fallthru
      _
  $region6: #{unary_factor_forward.1} parent=0 // loop_footer
    %s15 = sadd.s32 1, %s11
  $region7: #{unary_factor_forward.1} parent=0 // loop_footer_branch
    %10 = sbr.rel target = $region3
  $region8: #{unary_factor_forward.1} parent=0 // loop_exit
    _

</llo_original>
